<compile_context>
chip_gen: v6e
topology: v6e:2x2x1
jax: 0.10.0
libtpu: 0.0.40
codegen_flags: <defaults>
</compile_context>

<pallas_src>
import random

import numpy as np
import jax
import jax.numpy as jnp
from jax import lax
from jax.experimental import pallas as pl
from jax.experimental.pallas import tpu as pltpu

_MAX_DMAS_IN_FLIGHT = 4


def make_keep_indices(T, max_drop=2, p=0.5, seed=0):
    """Exact re-implementation of RandomDropFrames' index logic (host side)."""
    # TODO(synk): the Python `random` branching itself has no in-kernel
    # equivalent; it is resolved on the host and only the gather runs on TPU.
    rng = random.Random(seed)
    if rng.random() < p:
        drop_count = rng.randint(1, min(max_drop, T - 1))
        drop_indices = sorted(rng.sample(range(T), drop_count))
        keep_indices = list(range(T))
        for idx in drop_indices:
            keep_indices.remove(idx)
        while len(keep_indices) < T:
            keep_indices.append(keep_indices[-1])
        return keep_indices
    return list(range(T))


def _make_gather_kernel(T, nbuf):
    """Kernel: out[i] = x[idx[i]] for i in [0, T), via HBM->HBM frame DMAs."""

    def kernel(idx_ref, x_hbm, o_hbm, sems):
        def issue(i, carry):
            slot = i % nbuf

            # Before reusing a semaphore slot, retire the DMA issued `nbuf`
            # steps ago.  All copies have identical size, so a dummy
            # descriptor of the same frame shape is a valid wait target.
            @pl.when(i >= nbuf)
            def _():
                pltpu.make_async_copy(
                    x_hbm.at[0], o_hbm.at[0], sems.at[slot]
                ).wait()

            pltpu.make_async_copy(
                x_hbm.at[idx_ref[i]], o_hbm.at[i], sems.at[slot]
            ).start()
            return carry

        lax.fori_loop(0, T, issue, 0)

        def drain(i, carry):
            slot = i % nbuf
            pltpu.make_async_copy(
                x_hbm.at[0], o_hbm.at[0], sems.at[slot]
            ).wait()
            return carry

        # The last `nbuf` copies have not been waited on yet.
        lax.fori_loop(T - nbuf, T, drain, 0)

    return kernel


@jax.jit
def _gather_frames(x, idx):
    """out = x[idx] along axis 0 (idx: int32[T]); gather done by DMA."""
    T = x.shape[0]
    frame_shape = x.shape[1:]
    D = int(np.prod(frame_shape))

    # Flat (T, D) view; for a contiguous array this is a metadata-only
    # reshape under jit (no extra HBM pass), unlike v1's pad/slice passes.
    x_flat = x.reshape(T, D)
    nbuf = min(_MAX_DMAS_IN_FLIGHT, T)

    out_flat = pl.pallas_call(
        _make_gather_kernel(T, nbuf),
        out_shape=jax.ShapeDtypeStruct((T, D), x.dtype),
        grid_spec=pltpu.PrefetchScalarGridSpec(
            num_scalar_prefetch=1,     # keep_indices -> SMEM
            grid=(1,),                 # single step; all DMAs batched inside
            in_specs=[pl.BlockSpec(memory_space=pl.ANY)],   # x stays in HBM
            out_specs=pl.BlockSpec(memory_space=pl.ANY),    # out written by DMA
            scratch_shapes=[pltpu.SemaphoreType.DMA((nbuf,))],
        ),
        compiler_params=pltpu.CompilerParams(
            dimension_semantics=("arbitrary",),
            has_side_effects=True,
        ),
        cost_estimate=pl.CostEstimate(
            flops=0,
            transcendentals=0,
            bytes_accessed=2 * T * D * x.dtype.itemsize,
        ),
    )(idx, x_flat)

    return out_flat.reshape((T,) + frame_shape)


def random_drop_frames_pallas(x, keep_indices):
    """Forward pass of RandomDropFrames given the host-sampled keep_indices."""
    idx = jnp.asarray(keep_indices, dtype=jnp.int32)
    return _gather_frames(x, idx)


if __name__ == "__main__":
    # Small shapes consistent with the module: x is a sequence of T frames.
    T, C, H, W = 8, 4, 16, 16
    key = jax.random.PRNGKey(0)
    x = jax.random.normal(key, (T, C, H, W), dtype=jnp.float32)

    # Deterministic "randomness" matching the module's control flow.
    # seed=0 -> no drop (identity indices); seed=1 -> frames dropped + repeat.
    for seed in (0, 1):
        keep_indices = make_keep_indices(T, max_drop=2, p=0.5, seed=seed)
        out = random_drop_frames_pallas(x, keep_indices)
        out = jax.block_until_ready(out)

        # Sanity check against the pure-JAX reference gather (bitwise).
        ref = jnp.take(x, jnp.asarray(keep_indices, dtype=jnp.int32), axis=0)
        np.testing.assert_allclose(np.asarray(out), np.asarray(ref),
                                   rtol=0, atol=0)

    print("KERNEL_OK")
</pallas_src>

<mosaic_0001>
module attributes {stable_mosaic.version = 11 : i64} {
  func.func @kernel(%arg0: i32, %arg1: memref<8xi32, #tpu.memory_space<smem>>, %arg2: memref<8x1024xf32, #tpu.memory_space<any>>, %arg3: memref<8x1024xf32, #tpu.memory_space<any>>, %arg4: memref<4x!tpu.dma_semaphore, #tpu.memory_space<semaphore_mem>>) attributes {dimension_semantics = [#tpu.dimension_semantics<arbitrary>], iteration_bounds = array<i64: 1>, scalar_prefetch = 1 : i64, scratch_operands = 1 : i64, tpu.core_type = #tpu.core_type<tc>, window_params = [{}, {}]} {
    %c0_i32 = arith.constant 0 : i32
    %c8_i32 = arith.constant 8 : i32
    %0 = arith.addi %c0_i32, %c8_i32 : i32
    %c1_i32 = arith.constant 1 : i32
    scf.for %arg5 = %c0_i32 to %0 step %c1_i32  : i32 {
      %c4_i32_4 = arith.constant 4 : i32
      %c0_i32_5 = arith.constant 0 : i32
      %2 = arith.cmpi eq, %c4_i32_4, %c0_i32_5 : i32
      %c1_i32_6 = arith.constant 1 : i32
      %3 = arith.select %2, %c1_i32_6, %c4_i32_4 : i32
      %4 = arith.remsi %arg5, %3 : i32
      %c0_i32_7 = arith.constant 0 : i32
      %5 = arith.cmpi ne, %4, %c0_i32_7 : i32
      %c0_i32_8 = arith.constant 0 : i32
      %6 = arith.cmpi slt, %4, %c0_i32_8 : i32
      %c0_i32_9 = arith.constant 0 : i32
      %7 = arith.cmpi slt, %3, %c0_i32_9 : i32
      %8 = arith.xori %6, %7 : i1
      %9 = arith.andi %8, %5 : i1
      %10 = arith.addi %4, %3 : i32
      %11 = arith.select %9, %10, %4 : i32
      %c4_i32_10 = arith.constant 4 : i32
      %12 = arith.cmpi sge, %arg5, %c4_i32_10 : i32
      %13 = arith.extui %12 : i1 to i32
      %c0_i32_11 = arith.constant 0 : i32
      %14 = arith.cmpi ne, %13, %c0_i32_11 : i32
      scf.if %14 {
        %c0_i32_14 = arith.constant 0 : i32
        %c0_i32_15 = arith.constant 0 : i32
        %c0_i32_16 = arith.constant 0 : i32
        %23 = tpu.memref_slice %arg2[%c0_i32_14, %c0_i32_16] : memref<8x1024xf32, #tpu.memory_space<any>> -> memref<1x1024xf32, #tpu.memory_space<any>>
        %24 = tpu.memref_squeeze %23 : memref<1x1024xf32, #tpu.memory_space<any>> -> memref<1024xf32, #tpu.memory_space<any>>
        %c0_i32_17 = arith.constant 0 : i32
        %25 = tpu.memref_slice %arg3[%c0_i32_15, %c0_i32_17] : memref<8x1024xf32, #tpu.memory_space<any>> -> memref<1x1024xf32, #tpu.memory_space<any>>
        %26 = tpu.memref_squeeze %25 : memref<1x1024xf32, #tpu.memory_space<any>> -> memref<1024xf32, #tpu.memory_space<any>>
        %27 = tpu.memref_slice %arg4[%11] : memref<4x!tpu.dma_semaphore, #tpu.memory_space<semaphore_mem>> -> memref<1x!tpu.dma_semaphore, #tpu.memory_space<semaphore_mem>>
        %28 = tpu.memref_squeeze %27 : memref<1x!tpu.dma_semaphore, #tpu.memory_space<semaphore_mem>> -> memref<!tpu.dma_semaphore, #tpu.memory_space<semaphore_mem>>
        tpu.wait_dma2 semaphore(%28 : memref<!tpu.dma_semaphore, #tpu.memory_space<semaphore_mem>>) src(%24 : memref<1024xf32, #tpu.memory_space<any>>) dst(%26 : memref<1024xf32, #tpu.memory_space<any>>)
      } else {
      }
      %15 = arith.index_cast %arg5 : i32 to index
      %16 = memref.load %arg1[%15] : memref<8xi32, #tpu.memory_space<smem>>
      %c0_i32_12 = arith.constant 0 : i32
      %17 = tpu.memref_slice %arg2[%16, %c0_i32_12] : memref<8x1024xf32, #tpu.memory_space<any>> -> memref<1x1024xf32, #tpu.memory_space<any>>
      %18 = tpu.memref_squeeze %17 : memref<1x1024xf32, #tpu.memory_space<any>> -> memref<1024xf32, #tpu.memory_space<any>>
      %c0_i32_13 = arith.constant 0 : i32
      %19 = tpu.memref_slice %arg3[%arg5, %c0_i32_13] : memref<8x1024xf32, #tpu.memory_space<any>> -> memref<1x1024xf32, #tpu.memory_space<any>>
      %20 = tpu.memref_squeeze %19 : memref<1x1024xf32, #tpu.memory_space<any>> -> memref<1024xf32, #tpu.memory_space<any>>
      %21 = tpu.memref_slice %arg4[%11] : memref<4x!tpu.dma_semaphore, #tpu.memory_space<semaphore_mem>> -> memref<1x!tpu.dma_semaphore, #tpu.memory_space<semaphore_mem>>
      %22 = tpu.memref_squeeze %21 : memref<1x!tpu.dma_semaphore, #tpu.memory_space<semaphore_mem>> -> memref<!tpu.dma_semaphore, #tpu.memory_space<semaphore_mem>>
      tpu.enqueue_dma source(%18 : memref<1024xf32, #tpu.memory_space<any>>) target(%20 : memref<1024xf32, #tpu.memory_space<any>>) target_semaphore(%22 : memref<!tpu.dma_semaphore, #tpu.memory_space<semaphore_mem>>)
    }
    %c8_i32_0 = arith.constant 8 : i32
    %c4_i32 = arith.constant 4 : i32
    %c4_i32_1 = arith.constant 4 : i32
    %1 = arith.addi %c4_i32, %c4_i32_1 : i32
    %c1_i32_2 = arith.constant 1 : i32
    scf.for %arg5 = %c4_i32 to %1 step %c1_i32_2  : i32 {
      %c4_i32_4 = arith.constant 4 : i32
      %c0_i32_5 = arith.constant 0 : i32
      %2 = arith.cmpi eq, %c4_i32_4, %c0_i32_5 : i32
      %c1_i32_6 = arith.constant 1 : i32
      %3 = arith.select %2, %c1_i32_6, %c4_i32_4 : i32
      %4 = arith.remsi %arg5, %3 : i32
      %c0_i32_7 = arith.constant 0 : i32
      %5 = arith.cmpi ne, %4, %c0_i32_7 : i32
      %c0_i32_8 = arith.constant 0 : i32
      %6 = arith.cmpi slt, %4, %c0_i32_8 : i32
      %c0_i32_9 = arith.constant 0 : i32
      %7 = arith.cmpi slt, %3, %c0_i32_9 : i32
      %8 = arith.xori %6, %7 : i1
      %9 = arith.andi %8, %5 : i1
      %10 = arith.addi %4, %3 : i32
      %11 = arith.select %9, %10, %4 : i32
      %c0_i32_10 = arith.constant 0 : i32
      %c0_i32_11 = arith.constant 0 : i32
      %c0_i32_12 = arith.constant 0 : i32
      %12 = tpu.memref_slice %arg2[%c0_i32_10, %c0_i32_12] : memref<8x1024xf32, #tpu.memory_space<any>> -> memref<1x1024xf32, #tpu.memory_space<any>>
      %13 = tpu.memref_squeeze %12 : memref<1x1024xf32, #tpu.memory_space<any>> -> memref<1024xf32, #tpu.memory_space<any>>
      %c0_i32_13 = arith.constant 0 : i32
      %14 = tpu.memref_slice %arg3[%c0_i32_11, %c0_i32_13] : memref<8x1024xf32, #tpu.memory_space<any>> -> memref<1x1024xf32, #tpu.memory_space<any>>
      %15 = tpu.memref_squeeze %14 : memref<1x1024xf32, #tpu.memory_space<any>> -> memref<1024xf32, #tpu.memory_space<any>>
      %16 = tpu.memref_slice %arg4[%11] : memref<4x!tpu.dma_semaphore, #tpu.memory_space<semaphore_mem>> -> memref<1x!tpu.dma_semaphore, #tpu.memory_space<semaphore_mem>>
      %17 = tpu.memref_squeeze %16 : memref<1x!tpu.dma_semaphore, #tpu.memory_space<semaphore_mem>> -> memref<!tpu.dma_semaphore, #tpu.memory_space<semaphore_mem>>
      tpu.wait_dma2 semaphore(%17 : memref<!tpu.dma_semaphore, #tpu.memory_space<semaphore_mem>>) src(%13 : memref<1024xf32, #tpu.memory_space<any>>) dst(%15 : memref<1024xf32, #tpu.memory_space<any>>)
    }
    %c4_i32_3 = arith.constant 4 : i32
    return
  }
}

</mosaic_0001>

<llo_original>
// kernel: _gather_frames.1
$region0: #{_gather_frames.1}
  #allocation0 [shape = 'u32[]', space=smem, size = 0x4, offset = 0x4, fixed_abs, tag = 'smem constant byte address 0x4 - core index']
  #allocation1 [shape = 'u32[144,128]{1,0:T(1,128)}', space=vmem, size = 0x12000, scoped, tag = 'internal scratch']
  #allocation2 [shape = 's32[4]{0}', space=sflag, size = 0x10, scoped, tag = 'scratch operand']
  #allocation3 [shape = 's32[1]{0}', space=sflag, size = 0x4, scoped, tag = 'scoped memory for _gather_frames.1']
  #allocation4 [shape = 'u8[512]{0}', space=smem, size = 0x200, scoped, tag = 'prefetched SMEM operand 0']
  #allocation5 [shape = 's32[]', space=sflag, size = 0x4, offset = 0, fixed_abs, tag = 'sflag constant byte address 0x0 - dummy sync flag']
  %s0 = inlined_call_operand.vmem [shape: s32[8], index: 0, kind: input, shape index: {}]
  %s1 = inlined_call_operand.vmem [shape: f32[8,1024], index: 1, kind: input, shape index: {}]
  %s2 = inlined_call_operand.vmem [shape: f32[8,1024], index: 2, kind: output, shape index: {}]
  %s3 = sld [smem:[#allocation0]]
  $region57: #{_gather_frames.1} parent=0
    _
  %s5 = ssub.s32 1, %s3
  %s6 = scalar_select 0, %s5, %s3
  %s7 = sshll.u32 %s0, 4
  %s8 = int_to_ptr.vmem [resolvable:$true] %s7
  %10 = dma.vmem_to_smem %s8, 16, [#allocation4], [#allocation3]
  %11 = dma.done [#allocation3], 16
  %12 = sfence
  loop: start=0, step=1, limit=8
  $region2: #{_gather_frames.1} parent=0 // loop_pre_header
    _
  $region3: #{_gather_frames.1} parent=0 // loop_header
    %s14 = sphi 0, %s18
    %p15 = scmp.ge.s32.totalorder %s14, 8
  $region4: #{_gather_frames.1} parent=0 // loop_header_branch
    %17 = sbr.rel (%p15) target = $region8
  $region5: #{_gather_frames.1} parent=0 // loop_body
    %p19 = scmp.lt.s32.totalorder %s14, 0
    %s20 = ssub.s32 0, %s14
    %s21 = scalar_select %p19, %s20, %s14
    %s22 = sand.u32 %s21, 3
    %s23 = ssub.s32 0, %s22
    %s24 = scalar_select %p19, %s23, %s22
    %p25 = scmp.ne.s32.totalorder %s24, 0
    %p26 = scmp.lt.s32.totalorder %s24, 0
    %p27 = pnand %p26, %p25
    %p28 = pneg %p27
    %s29 = sadd.s32 %s24, 4
    %s30 = scalar_select %p28, %s29, %s24
    %p31 = scmp.ge.s32.totalorder %s14, 4
    // Predicated region
    $region9: #{_gather_frames.1} parent=5 // pred_check
      %p32 = pneg %p31
    $region10: #{_gather_frames.1} parent=5 // pred_check_branch
      %34 = sbr.rel (%p32) target = $region12
    $region11: #{_gather_frames.1} parent=5 // pred_region
      %s35 = scalar_lea.sflag [#allocation2], %s30
      %37 = dma.done %s35, 128
    $region12: #{_gather_frames.1} parent=5 // pred_fallthru
      _
    %s38 = sld [smem:[#allocation4 + %s14]]
    %s39 = sshrl.u32 %s38, 3
    %s40 = sand.u32 %s38, 7
    %s41 = smul.u32 %s39, 64
    %s42 = sadd.s32 %s40, %s41
    %s43 = scalar_lea.vmem %s1, %s42
    %s44 = sshrl.u32 %s14, 3
    %s45 = sand.u32 %s14, 7
    %s46 = smul.u32 %s44, 64
    %s47 = sadd.s32 %s45, %s46
    %s48 = scalar_lea.vmem %s2, %s47
    %s49 = scalar_lea.sflag [#allocation2], %s30
    %p51 = scmp.lt.u32.totalorder 1, 8
    %p52 = pneg %p51
    // Predicated region
    $region13: #{_gather_frames.1} parent=5 // pred_check
      _
    $region14: #{_gather_frames.1} parent=5 // pred_check_branch
      %54 = sbr.rel (%p51) target = $region16
    $region15: #{_gather_frames.1} parent=5 // pred_region
      %s84 = sand.u32 1, 7
      %p85 = scmp.eq.s32.totalorder %s84, 0
      %p86 = pneg %p85
      // Predicated region
      $region28: #{_gather_frames.1} parent=15 // pred_check
        _
      $region29: #{_gather_frames.1} parent=15 // pred_check_branch
        %88 = sbr.rel (%p85) target = $region31
      $region30: #{_gather_frames.1} parent=15 // pred_region
        %s89 = sand.u32 1, 7
        %s90 = ssub.s32 1, %s89
        %s91 = scalar_lea.vmem %s43, %s90
        %s92 = ssub.s32 1, %s89
        %s93 = scalar_lea.vmem %s48, %s92
        loop: start=0, step=1, limit=1
        $region32: #{_gather_frames.1} parent=30 // loop_pre_header
          _
        $region33: #{_gather_frames.1} parent=30 // loop_header
          %s95 = sphi 0, %s99
          %p96 = scmp.ge.s32.totalorder %s95, 1
          %s100 = sphi %s43, %s43
          %s101 = sphi %s48, %s48
        $region34: #{_gather_frames.1} parent=30 // loop_header_branch
          %98 = sbr.rel (%p96) target = $region38
        $region35: #{_gather_frames.1} parent=30 // loop_body
          _
        $region36: #{_gather_frames.1} parent=30 // loop_footer
          %s99 = sadd.s32 1, %s95
        $region37: #{_gather_frames.1} parent=30 // loop_footer_branch
          %94 = sbr.rel target = $region33
        $region38: #{_gather_frames.1} parent=30 // loop_exit
          _
        %s102 = sshll.u32 1, %s89
        %s103 = ssub.s32 %s102, 1
        loop: start=0, step=1, limit=1
        $region39: #{_gather_frames.1} parent=30 // loop_pre_header
          _
        $region40: #{_gather_frames.1} parent=30 // loop_header
          %s105 = sphi 0, %s109
          %p106 = scmp.ge.s32.totalorder %s105, 1
          %s110 = sphi %s91, %s91
          %s111 = sphi %s93, %s93
        $region41: #{_gather_frames.1} parent=30 // loop_header_branch
          %108 = sbr.rel (%p106) target = $region45
        $region42: #{_gather_frames.1} parent=30 // loop_body
          %v112 = vld [vmem:[%s110] sm:%s103]
          %113 = vst [vmem:[%s111] sm:%s103] %v112
          %v114 = vld [vmem:[%s110 + $0x8] sm:%s103]
          %115 = vst [vmem:[%s111 + $0x8] sm:%s103] %v114
          %v116 = vld [vmem:[%s110 + $0x10] sm:%s103]
          %117 = vst [vmem:[%s111 + $0x10] sm:%s103] %v116
          %v118 = vld [vmem:[%s110 + $0x18] sm:%s103]
          %119 = vst [vmem:[%s111 + $0x18] sm:%s103] %v118
          %v120 = vld [vmem:[%s110 + $0x20] sm:%s103]
          %121 = vst [vmem:[%s111 + $0x20] sm:%s103] %v120
          %v122 = vld [vmem:[%s110 + $0x28] sm:%s103]
          %123 = vst [vmem:[%s111 + $0x28] sm:%s103] %v122
          %v124 = vld [vmem:[%s110 + $0x30] sm:%s103]
          %125 = vst [vmem:[%s111 + $0x30] sm:%s103] %v124
          %v126 = vld [vmem:[%s110 + $0x38] sm:%s103]
          %127 = vst [vmem:[%s111 + $0x38] sm:%s103] %v126
        $region43: #{_gather_frames.1} parent=30 // loop_footer
          %s109 = sadd.s32 1, %s105
        $region44: #{_gather_frames.1} parent=30 // loop_footer_branch
          %104 = sbr.rel target = $region40
        $region45: #{_gather_frames.1} parent=30 // loop_exit
          _
      $region31: #{_gather_frames.1} parent=15 // pred_fallthru
        _
    $region16: #{_gather_frames.1} parent=5 // pred_fallthru
      _
    // Predicated region
    $region17: #{_gather_frames.1} parent=5 // pred_check
      %p55 = pneg %p51
    $region18: #{_gather_frames.1} parent=5 // pred_check_branch
      %57 = sbr.rel (%p55) target = $region20
    $region19: #{_gather_frames.1} parent=5 // pred_region
      %s58 = sshll.u32 1, 1
      %s59 = ssub.s32 %s58, 1
      loop: start=0, step=1, limit=1
      $region21: #{_gather_frames.1} parent=19 // loop_pre_header
        _
      $region22: #{_gather_frames.1} parent=19 // loop_header
        %s61 = sphi 0, %s65
        %p62 = scmp.ge.s32.totalorder %s61, 1
        %s66 = sphi %s43, %s43
        %s67 = sphi %s48, %s48
      $region23: #{_gather_frames.1} parent=19 // loop_header_branch
        %64 = sbr.rel (%p62) target = $region27
      $region24: #{_gather_frames.1} parent=19 // loop_body
        %v68 = vld [vmem:[%s66] sm:%s59]
        %69 = vst [vmem:[%s67] sm:%s59] %v68
        %v70 = vld [vmem:[%s66 + $0x8] sm:%s59]
        %71 = vst [vmem:[%s67 + $0x8] sm:%s59] %v70
        %v72 = vld [vmem:[%s66 + $0x10] sm:%s59]
        %73 = vst [vmem:[%s67 + $0x10] sm:%s59] %v72
        %v74 = vld [vmem:[%s66 + $0x18] sm:%s59]
        %75 = vst [vmem:[%s67 + $0x18] sm:%s59] %v74
        %v76 = vld [vmem:[%s66 + $0x20] sm:%s59]
        %77 = vst [vmem:[%s67 + $0x20] sm:%s59] %v76
        %v78 = vld [vmem:[%s66 + $0x28] sm:%s59]
        %79 = vst [vmem:[%s67 + $0x28] sm:%s59] %v78
        %v80 = vld [vmem:[%s66 + $0x30] sm:%s59]
        %81 = vst [vmem:[%s67 + $0x30] sm:%s59] %v80
        %v82 = vld [vmem:[%s66 + $0x38] sm:%s59]
        %83 = vst [vmem:[%s67 + $0x38] sm:%s59] %v82
      $region25: #{_gather_frames.1} parent=19 // loop_footer
        %s65 = sadd.s32 1, %s61
      $region26: #{_gather_frames.1} parent=19 // loop_footer_branch
        %60 = sbr.rel target = $region22
      $region27: #{_gather_frames.1} parent=19 // loop_exit
        _
    $region20: #{_gather_frames.1} parent=5 // pred_fallthru
      _
    // Predicated region
    $region46: #{_gather_frames.1} parent=5 // pred_check
      _
    $region47: #{_gather_frames.1} parent=5 // pred_check_branch
      %130 = sbr.rel (0) target = $region49
    $region48: #{_gather_frames.1} parent=5 // pred_region
      %131 = vsyncadd %s49, 128
    $region49: #{_gather_frames.1} parent=5 // pred_fallthru
      _
  $region6: #{_gather_frames.1} parent=0 // loop_footer
    %s18 = sadd.s32 1, %s14
  $region7: #{_gather_frames.1} parent=0 // loop_footer_branch
    %13 = sbr.rel target = $region3
  $region8: #{_gather_frames.1} parent=0 // loop_exit
    _
  loop: start=4, step=1, limit=8
  $region50: #{_gather_frames.1} parent=0 // loop_pre_header
    _
  $region51: #{_gather_frames.1} parent=0 // loop_header
    %s133 = sphi 4, %s137
    %p134 = scmp.ge.s32.totalorder %s133, 8
  $region52: #{_gather_frames.1} parent=0 // loop_header_branch
    %136 = sbr.rel (%p134) target = $region56
  $region53: #{_gather_frames.1} parent=0 // loop_body
    %p138 = scmp.lt.s32.totalorder %s133, 0
    %s139 = ssub.s32 0, %s133
    %s140 = scalar_select %p138, %s139, %s133
    %s141 = sand.u32 %s140, 3
    %s142 = ssub.s32 0, %s141
    %s143 = scalar_select %p138, %s142, %s141
    %p144 = scmp.ne.s32.totalorder %s143, 0
    %p145 = scmp.lt.s32.totalorder %s143, 0
    %p146 = pnand %p145, %p144
    %p147 = pneg %p146
    %s148 = sadd.s32 %s143, 4
    %s149 = scalar_select %p147, %s148, %s143
    %s150 = scalar_lea.sflag [#allocation2], %s149
    %152 = dma.done %s150, 128
  $region54: #{_gather_frames.1} parent=0 // loop_footer
    %s137 = sadd.s32 1, %s133
  $region55: #{_gather_frames.1} parent=0 // loop_footer_branch
    %132 = sbr.rel target = $region51
  $region56: #{_gather_frames.1} parent=0 // loop_exit
    _
  %153 = vsyncmov [#allocation2]
  %s154 = vpop.sfrf %153
  %p155 = scmp.eq.s32.totalorder %s154, 0
  %p156 = pneg %p155
  %158 = shalt.err (%p156)
  %s159 = scalar_lea.sflag [#allocation2], 1
  %160 = vsyncmov %s159
  %s161 = vpop.sfrf %160
  %p162 = scmp.eq.s32.totalorder %s161, 0
  %p163 = pneg %p162
  %165 = shalt.err (%p163)
  %s166 = scalar_lea.sflag [#allocation2], 2
  %167 = vsyncmov %s166
  %s168 = vpop.sfrf %167
  %p169 = scmp.eq.s32.totalorder %s168, 0
  %p170 = pneg %p169
  %172 = shalt.err (%p170)
  %s173 = scalar_lea.sflag [#allocation2], 3
  %174 = vsyncmov %s173
  %s175 = vpop.sfrf %174
  %p176 = scmp.eq.s32.totalorder %s175, 0
  %p177 = pneg %p176
  %179 = shalt.err (%p177)

</llo_original>
